<compile_context>
chip_gen: v6e
topology: v6e:2x2x1
jax: 0.10.0
libtpu: 0.0.40
codegen_flags: <defaults>
</compile_context>

<pallas_src>
import functools

import jax
import jax.numpy as jnp
from jax.experimental import pallas as pl
from jax.experimental.pallas import tpu as pltpu


def _proj_kernel(x_ref, w_ref, o_ref):
    # x_ref: (nb, C_in, ts)   nb images' channels x spatial-tile columns
    # w_ref: (C_out, C_in)    full weight matrix, resident across the grid
    # o_ref: (nb, C_out, ts)  lane-dense output tile
    w = w_ref[...]
    for b in range(x_ref.shape[0]):  # nb is static -> unrolled 2-D MXU dots
        o_ref[b] = jnp.dot(
            w, x_ref[b], preferred_element_type=jnp.float32
        ).astype(o_ref.dtype)


def _pad8(c):
    return ((c + 7) // 8) * 8


def _choose_tiles(N, HW, C_in, C_out, itemsize, block_bytes, max_batch_unroll=64):
    """Pick (nb, ts) so each grid step moves ~block_bytes of HBM traffic."""
    per_col = (C_in + C_out) * itemsize                       # HBM bytes / spatial column
    padded_per_col = (_pad8(C_in) + _pad8(C_out)) * itemsize  # VMEM bytes / spatial column
    # Keep the double-buffered live set comfortably inside every chip's
    # default scoped VMEM (v5e's 16 MiB is the tightest).
    vmem_cap = 12 * 1024 * 1024
    budget_cols = max(128, min(block_bytes // per_col, vmem_cap // (2 * padded_per_col)))

    if HW > budget_cols:
        ts = max(128, (budget_cols // 128) * 128)  # lane-dense, multiple of 128
        nb = 1
    else:
        ts = HW                                    # full spatial extent in one block
        nb = max(1, min(N, budget_cols // max(HW, 1), max_batch_unroll))

    # v7x has 2 TensorCores: keep >= 2 grid programs when the shape allows it.
    if pl.cdiv(N, nb) * pl.cdiv(HW, ts) < 2:
        if N >= 2 and nb >= 2:
            nb = pl.cdiv(N, 2)
        elif HW >= 256:
            ts = max(128, ((HW // 2) // 128) * 128)
    return nb, ts


@functools.partial(jax.jit, static_argnames=("block_bytes", "use_fast_path"))
def projector_block(x_nchw, weight, *, block_bytes=4 * 1024 * 1024,
                    use_fast_path=True):
    """1x1 conv, no bias (matches nn.Conv2d(kernel_size=1, padding=0, bias=False)).

    x_nchw: (N, C_in, H, W)
    weight: (C_out, C_in) or the raw Conv2d weight (C_out, C_in, 1, 1)
    returns (N, C_out, H, W)
    """
    N, C_in, H, W = x_nchw.shape
    if weight.ndim == 4:
        weight = weight.reshape(weight.shape[0], weight.shape[1])
    C_out = weight.shape[0]
    HW = H * W
    itemsize = x_nchw.dtype.itemsize

    # Tiny problems: XLA's fused einsum is already at roofline; a custom kernel
    # only adds dispatch + pipeline-setup overhead there.
    if use_fast_path and N * HW * (C_in + C_out) * itemsize < 512 * 1024:
        return jnp.einsum(
            "oc,nchw->nohw", weight, x_nchw,
            preferred_element_type=jnp.float32).astype(x_nchw.dtype)

    x3d = x_nchw.reshape(N, C_in, HW)  # free reshape (same contiguous layout)
    nb, ts = _choose_tiles(N, HW, C_in, C_out, itemsize, block_bytes)
    grid = (pl.cdiv(N, nb), pl.cdiv(HW, ts))  # ragged blocks handled by Pallas

    y3d = pl.pallas_call(
        _proj_kernel,
        out_shape=jax.ShapeDtypeStruct((N, C_out, HW), x_nchw.dtype),
        grid=grid,
        in_specs=[
            pl.BlockSpec((nb, C_in, ts), lambda n, s: (n, 0, s)),
            pl.BlockSpec((C_out, C_in), lambda n, s: (0, 0)),
        ],
        out_specs=pl.BlockSpec((nb, C_out, ts), lambda n, s: (n, 0, s)),
        compiler_params=pltpu.CompilerParams(
            dimension_semantics=("parallel", "parallel"),
            vmem_limit_bytes=32 * 1024 * 1024,
        ),
        cost_estimate=pl.CostEstimate(
            flops=2 * N * C_out * C_in * HW,
            bytes_accessed=itemsize * (N * HW * (C_in + C_out) + C_in * C_out),
            transcendentals=0,
        ),
    )(x3d, weight)

    return y3d.reshape(N, C_out, H, W)  # free reshape back to NCHW


if __name__ == "__main__":
    # Small shapes consistent with the module: batch=2, in_features=4,
    # out_features=8, spatial=16x16.
    N, C_in, C_out, H, W = 2, 4, 8, 16, 16

    key = jax.random.PRNGKey(0)
    kx, kw, kx2 = jax.random.split(key, 3)
    x = jax.random.normal(kx, (N, C_in, H, W), dtype=jnp.float32)
    # Synthetic Conv2d weight, same shape as nn.Conv2d(k=1, bias=False).weight.
    weight = jax.random.normal(kw, (C_out, C_in, 1, 1), dtype=jnp.float32) * 0.1
    w2d = weight.reshape(C_out, C_in)

    # 1) Force the Pallas path at the module's small shapes (full-spatial
    #    blocks, batch split across >= 2 grid programs).
    y = jax.block_until_ready(projector_block(x, weight, use_fast_path=False))
    y_ref = jnp.einsum("oc,nchw->nohw", w2d, x)
    assert y.shape == (N, C_out, H, W)
    assert jnp.allclose(y, y_ref, atol=1e-5, rtol=1e-5)

    # 2) Ragged spatial tiling (H*W not a multiple of the 128-aligned tile):
    #    exercises masked last-block stores with no wrapper pad/slice.
    H2 = W2 = 37
    x2 = jax.random.normal(kx2, (N, C_in, H2, W2), dtype=jnp.float32)
    y2 = jax.block_until_ready(
        projector_block(x2, weight, block_bytes=64 * 1024, use_fast_path=False))
    y2_ref = jnp.einsum("oc,nchw->nohw", w2d, x2)
    assert y2.shape == (N, C_out, H2, W2)
    assert jnp.allclose(y2, y2_ref, atol=1e-5, rtol=1e-5)

    # 3) Default call on the tiny demo shapes takes the einsum fast path.
    y3 = jax.block_until_ready(projector_block(x, weight))
    assert jnp.allclose(y3, y_ref, atol=1e-5, rtol=1e-5)

    print("KERNEL_OK")
</pallas_src>

<mosaic_0001>
module attributes {stable_mosaic.version = 11 : i64} {
  func.func @_proj_kernel(%arg0: i32, %arg1: i32, %arg2: memref<1x4x256xf32, #tpu.memory_space<vmem>>, %arg3: memref<8x4xf32, #tpu.memory_space<vmem>>, %arg4: memref<1x8x256xf32, #tpu.memory_space<vmem>>) attributes {dimension_semantics = [#tpu.dimension_semantics<parallel>, #tpu.dimension_semantics<parallel>], iteration_bounds = array<i64: 2, 1>, scalar_prefetch = 0 : i64, scratch_operands = 0 : i64, tpu.core_type = #tpu.core_type<tc>, window_params = [{transform_indices = @transform_0, window_bounds = array<i64: 1, 4, 256>}, {pipeline_mode = #tpu.pipeline_mode<synchronous>, transform_indices = @transform_1, window_bounds = array<i64: 8, 4>}, {transform_indices = @transform_2, window_bounds = array<i64: 1, 8, 256>}]} {
    %c0 = arith.constant 0 : index
    %c0_0 = arith.constant 0 : index
    %0 = vector.load %arg3[%c0, %c0_0] : memref<8x4xf32, #tpu.memory_space<vmem>>, vector<8x4xf32>
    %c0_1 = arith.constant 0 : index
    %c0_2 = arith.constant 0 : index
    %c0_3 = arith.constant 0 : index
    %1 = vector.load %arg2[%c0_1, %c0_2, %c0_3] : memref<1x4x256xf32, #tpu.memory_space<vmem>>, vector<1x4x256xf32>
    %2 = vector.shape_cast %1 : vector<1x4x256xf32> to vector<4x256xf32>
    %cst = arith.constant dense<0.000000e+00> : vector<8x256xf32>
    %3 = tpu.matmul %0, %2, %cst {dimension_numbers = #tpu.dot_dimension_numbers<[1], [0], [0], [1], [0, 0, 1, 1], [], []>} : vector<8x4xf32>, vector<4x256xf32>, vector<8x256xf32> -> vector<8x256xf32>
    %c0_4 = arith.constant 0 : index
    %c0_5 = arith.constant 0 : index
    %c0_6 = arith.constant 0 : index
    %4 = vector.load %arg4[%c0_4, %c0_5, %c0_6] : memref<1x8x256xf32, #tpu.memory_space<vmem>>, vector<1x8x256xf32>
    %5 = vector.shape_cast %4 : vector<1x8x256xf32> to vector<8x256xf32>
    %6 = vector.shape_cast %3 : vector<8x256xf32> to vector<1x8x256xf32>
    tpu.vector_store %arg4[%c0_4, %c0_5, %c0_6], %6 {strides = array<i32>} : memref<1x8x256xf32, #tpu.memory_space<vmem>>, vector<1x8x256xf32>,
    return
  }
  func.func @transform_0(%arg0: i32, %arg1: i32) -> (i32, i32, i32) {
    %c0_i32 = arith.constant 0 : i32
    %c0_i32_0 = arith.constant 0 : i32
    return %arg0, %c0_i32, %arg1 : i32, i32, i32
  }
  func.func @transform_1(%arg0: i32, %arg1: i32) -> (i32, i32) {
    %c0_i32 = arith.constant 0 : i32
    %c0_i32_0 = arith.constant 0 : i32
    %c0_i32_1 = arith.constant 0 : i32
    return %c0_i32, %c0_i32_0 : i32, i32
  }
  func.func @transform_2(%arg0: i32, %arg1: i32) -> (i32, i32, i32) {
    %c0_i32 = arith.constant 0 : i32
    %c0_i32_0 = arith.constant 0 : i32
    return %arg0, %c0_i32, %arg1 : i32, i32, i32
  }
}

</mosaic_0001>

<llo_original>
// kernel: projector_block.1
$region0: #{projector_block.1}
  #allocation0 [shape = 'u32[]', space=smem, size = 0x4, offset = 0x4, fixed_abs, tag = 'smem constant byte address 0x4 - core index']
  #allocation1 [shape = 'u32[144,128]{1,0:T(1,128)}', space=vmem, size = 0x12000, scoped, tag = 'internal scratch']
  %s0 = inlined_call_operand.vmem [shape: f32[2,4,256], index: 0, kind: input, shape index: {}]
  %s1 = inlined_call_operand.vmem [shape: f32[8,4], index: 1, kind: input, shape index: {}]
  %s2 = inlined_call_operand.vmem [shape: f32[2,8,256], index: 2, kind: output, shape index: {}]
  %s3 = sld [smem:[#allocation0]]
  $region41: #{projector_block.1} parent=0
    _
  %s5 = ssub.s32 1, %s3
  %s6 = scalar_select 0, %s5, %s3
  loop: start=0, step=1, limit=4
  $region2: #{projector_block.1} parent=0 // loop_pre_header
    _
  $region3: #{projector_block.1} parent=0 // loop_header
    %s8 = sphi 0, %s12
    %p9 = scmp.ge.s32.totalorder %s8, 4
    %s15 = sphi 0, %s27
    %s16 = sphi 0, %s23
    %s17 = sphi 0, %s15
    %s18 = sphi 0, %s16
    %s19 = sphi 0, %s17
    %s20 = sphi 0, %s18
    %s32 = sphi 0, %s34
    %s35 = sphi 0, %s32
    %s36 = sphi 0, %s35
    %s52 = sphi 0, %s36
    %s56 = sphi 0, %s56
    %s58 = sphi 0, %s56
    %s59 = sphi 0, %s58
    %s73 = sphi 0, %s59
    %s81 = sphi 0, %s83
    %s84 = sphi 0, %s81
    %s85 = sphi 0, %s84
    %s101 = sphi 0, %s85
  $region4: #{projector_block.1} parent=0 // loop_header_branch
    %11 = sbr.rel (%p9) target = $region8
  $region5: #{projector_block.1} parent=0 // loop_body
    %s13 = ssub.s32 %s8, 1
    %s14 = ssub.s32 %s8, 2
    %s21 = sadd.s32 1, %s16
    %p22 = scmp.ge.s32.totalorder %s21, 1
    %s23 = scalar_select %p22, 0, %s21
    %s24 = sadd.s32 1, %s15
    %s25 = scalar_select %p22, %s24, %s15
    %p26 = scmp.ge.s32.totalorder %s25, 2
    %s27 = scalar_select %p26, 0, %s25
    %s28 = ssub.s32 %s15, %s27
    %s29 = ssub.s32 %s16, %s23
    %s30 = sor.u32 %s28, %s29
    %p31 = scmp.eq.s32.totalorder %s30, 0
    %s33 = sadd.s32 %s32, 1
    %s34 = scalar_select %p31, %s32, %s33
    %p37 = pneg %p31
    %p38 = scmp.eq.s32.totalorder %s8, 1
    %p39 = por %p37, %p38
    %p40 = scmp.ne.s32.totalorder %s32, %s35
    %p41 = scmp.eq.s32.totalorder %s8, 0
    %p42 = por %p40, %p41
    %p43 = scmp.ne.s32.totalorder %s32, %s35
    %p44 = scmp.eq.s32.totalorder %s13, 1
    %p45 = por %p43, %p44
    %p46 = scmp.ne.s32.totalorder %s35, %s36
    %p47 = scmp.eq.s32.totalorder %s13, 0
    %p48 = por %p46, %p47
    %p49 = scmp.ne.s32.totalorder %s35, %s36
    %p50 = scmp.eq.s32.totalorder %s14, 1
    %p51 = por %p49, %p50
    %p53 = scmp.ne.s32.totalorder %s36, %s52
    %p54 = scmp.eq.s32.totalorder %s14, 0
    %p55 = por %p53, %p54
    %s57 = sadd.s32 %s56, 1
    %p60 = scmp.eq.s32.totalorder %s8, 1
    %p61 = scmp.ne.s32.totalorder %s56, %s58
    %p62 = scmp.eq.s32.totalorder %s8, 0
    %p63 = por %p61, %p62
    %p64 = scmp.ne.s32.totalorder %s56, %s58
    %p65 = scmp.eq.s32.totalorder %s13, 1
    %p66 = por %p64, %p65
    %p67 = scmp.ne.s32.totalorder %s58, %s59
    %p68 = scmp.eq.s32.totalorder %s13, 0
    %p69 = por %p67, %p68
    %p70 = scmp.ne.s32.totalorder %s58, %s59
    %p71 = scmp.eq.s32.totalorder %s14, 1
    %p72 = por %p70, %p71
    %p74 = scmp.ne.s32.totalorder %s59, %s73
    %p75 = scmp.eq.s32.totalorder %s14, 0
    %p76 = por %p74, %p75
    %s77 = ssub.s32 %s15, %s27
    %s78 = ssub.s32 %s16, %s23
    %s79 = sor.u32 %s77, %s78
    %p80 = scmp.eq.s32.totalorder %s79, 0
    %s82 = sadd.s32 %s81, 1
    %s83 = scalar_select %p80, %s81, %s82
    %p86 = pneg %p80
    %p87 = scmp.eq.s32.totalorder %s8, 1
    %p88 = por %p86, %p87
    %p89 = scmp.ne.s32.totalorder %s81, %s84
    %p90 = scmp.eq.s32.totalorder %s8, 0
    %p91 = por %p89, %p90
    %p92 = scmp.ne.s32.totalorder %s81, %s84
    %p93 = scmp.eq.s32.totalorder %s13, 1
    %p94 = por %p92, %p93
    %p95 = scmp.ne.s32.totalorder %s84, %s85
    %p96 = scmp.eq.s32.totalorder %s13, 0
    %p97 = por %p95, %p96
    %p98 = scmp.ne.s32.totalorder %s84, %s85
    %p99 = scmp.eq.s32.totalorder %s14, 1
    %p100 = por %p98, %p99
    %p102 = scmp.ne.s32.totalorder %s85, %s101
    %p103 = scmp.eq.s32.totalorder %s14, 0
    %p104 = por %p102, %p103
    %p105 = scmp.le.s32.totalorder 1, %s8
    %p106 = scmp.lt.s32.totalorder %s8, 3
    %p107 = pnand %p105, %p106
    %p108 = pneg %p107
    // Predicated region
    $region9: #{projector_block.1} parent=5 // pred_check
      _
    $region10: #{projector_block.1} parent=5 // pred_check_branch
      %110 = sbr.rel (%p107) target = $region12
    $region11: #{projector_block.1} parent=5 // pred_region
      %s111 = ssub.s32 %s8, 1
      // Predicated region
      $region13: #{projector_block.1} parent=11 // pred_check
        %p112 = pneg %p69
      $region14: #{projector_block.1} parent=11 // pred_check_branch
        %114 = sbr.rel (%p112) target = $region16
      $region15: #{projector_block.1} parent=11 // pred_region
        _
      $region16: #{projector_block.1} parent=11 // pred_fallthru
        _
    $region12: #{projector_block.1} parent=5 // pred_fallthru
      _
    %p115 = scmp.lt.s32.totalorder %s8, 2
    // Predicated region
    $region17: #{projector_block.1} parent=5 // pred_check
      %p116 = pneg %p115
    $region18: #{projector_block.1} parent=5 // pred_check_branch
      %118 = sbr.rel (%p116) target = $region20
    $region19: #{projector_block.1} parent=5 // pred_region
      // Predicated region
      $region21: #{projector_block.1} parent=19 // pred_check
        %p119 = pneg %p42
      $region22: #{projector_block.1} parent=19 // pred_check_branch
        %121 = sbr.rel (%p119) target = $region24
      $region23: #{projector_block.1} parent=19 // pred_region
        %s122 = smul.u32 2, %s16
        %p123 = scmp.lt.s32.totalorder %s15, 1
        %s124 = scalar_select %p123, %s15, 1
        %p125 = scmp.lt.s32.totalorder %s122, 1
        %s126 = scalar_select %p125, %s122, 1
        %s127 = smul.addr %s124, 2
        %s128 = sadd.s32 %s126, %s127
        %s129 = smul.addr %s128, 4
        %s130 = scalar_lea.vmem %s0, %s129
        %s131 = smul.u32 2, %s16
      $region24: #{projector_block.1} parent=19 // pred_fallthru
        _
    $region20: #{projector_block.1} parent=5 // pred_fallthru
      _
    %p132 = scmp.le.s32.totalorder 1, %s8
    %p133 = scmp.lt.s32.totalorder %s8, 3
    %p134 = pnand %p132, %p133
    %p135 = pneg %p134
    // Predicated region
    $region25: #{projector_block.1} parent=5 // pred_check
      _
    $region26: #{projector_block.1} parent=5 // pred_check_branch
      %137 = sbr.rel (%p134) target = $region28
    $region27: #{projector_block.1} parent=5 // pred_region
      %s138 = ssub.s32 %s8, 1
      %s139 = smul.u32 2, %s18
      %p140 = scmp.lt.s32.totalorder %s17, 1
      %s141 = scalar_select %p140, %s17, 1
      %p142 = scmp.lt.s32.totalorder %s139, 1
      %s143 = scalar_select %p142, %s139, 1
      %s144 = smul.addr %s141, 2
      %s145 = sadd.s32 %s143, %s144
      %s146 = smul.addr %s145, 4
      %s147 = scalar_lea.vmem %s0, %s146
      %p148 = pneg %p48
      %p149 = pneg %p45
      %p150 = pneg %p69
      %p151 = pneg %p66
      %p152 = pneg %p97
      %p153 = pneg %p94
      %s154 = smul.u32 2, %s18
      %p155 = scmp.lt.s32.totalorder %s17, 1
      %s156 = scalar_select %p155, %s17, 1
      %p157 = scmp.lt.s32.totalorder %s154, 1
      %s158 = scalar_select %p157, %s154, 1
      %s159 = smul.addr %s156, 2
      %s160 = sadd.s32 %s158, %s159
      %s161 = smul.addr %s160, 8
      %s162 = scalar_lea.vmem %s2, %s161
      %s163 = smul.u32 2, %s18
      %p164 = scmp.lt.s32.totalorder %s17, 1
      %s165 = scalar_select %p164, %s17, 1
      %p166 = scmp.lt.s32.totalorder %s163, 1
      %s167 = scalar_select %p166, %s163, 1
      %s168 = smul.addr %s165, 2
      %s169 = sadd.s32 %s167, %s168
      %s170 = smul.addr %s169, 4
      %s171 = scalar_lea.vmem %s0, %s170
      %s172 = smul.u32 2, %s18
      %s173 = smul.u32 2, %s18
      %p174 = scmp.lt.s32.totalorder %s17, 1
      %s175 = scalar_select %p174, %s17, 1
      %p176 = scmp.lt.s32.totalorder %s173, 1
      %s177 = scalar_select %p176, %s173, 1
      %s178 = smul.addr %s175, 2
      %s179 = sadd.s32 %s177, %s178
      %s180 = smul.addr %s179, 8
      %s181 = scalar_lea.vmem %s2, %s180
      %s182 = smul.u32 2, %s18
      %v183 = vld [vmem:[%s1] sm:$0xff]
      %v184 = vld [vmem:[%s171] sm:$0xff]
      %v186 = vcombine.high %v184, %v184
      %vm187 = vcmask 31744
      %v189 = vsel %vm187, %v183, 0
      %vm191 = vcmask 1043456
      %v192 = vsel %vm191, %v184, 0
      %v194 = vsel %vm191, %v186, 0
      %196 = vmatprep.subr.mxu0 0.0
      %197 = vmatpush1.msra.mxu0 0.0
      %198 = vmatprep.subr.mxu0 0.0
      %199 = vmatpush1.msra.mxu0 0.0
      %200 = vmatprep.subr.mxu0 0.0
      %201 = vmatpush1.msra.mxu0 0.0
      %202 = vmatprep.subr.mxu0 0.0
      %203 = vmatpush1.msra.mxu0 0.0
      %204 = vmatprep.subr.mxu0 0.0
      %205 = vmatpush1.msra.mxu0 0.0
      %206 = vmatprep.subr.mxu0 0.0
      %207 = vmatpush1.msra.mxu0 0.0
      %208 = vmatprep.subr.mxu0 0.0
      %209 = vmatpush1.msra.mxu0 0.0
      %210 = vmatprep.subr.mxu0 0.0
      %211 = vmatpush1.msra.mxu0 0.0
      %212 = vmatprep.subr.mxu0 0.0
      %213 = vmatpush1.msra.mxu0 0.0
      %214 = vmatprep.subr.mxu0 0.0
      %215 = vmatpush1.msra.mxu0 0.0
      %216 = vmatprep.subr.mxu0 0.0
      %217 = vmatpush1.msra.mxu0 0.0
      %218 = vmatprep.subr.mxu0 0.0
      %219 = vmatpush1.msra.mxu0 0.0
      %220 = vmatprep.subr.mxu0 0.0
      %221 = vmatpush1.msra.mxu0 0.0
      %222 = vmatprep.subr.mxu0 0.0
      %223 = vmatpush1.msra.mxu0 0.0
      %224 = vmatprep.subr.mxu0 0.0
      %225 = vmatpush1.msra.mxu0 0.0
      %226 = vmatprep.subr.mxu0 %v194
      %227 = vmatpush1.msra.mxu0 %v192
      %228 = vmatprep.subr.mxu0 0.0
      %229 = vmatpush2.msra.mxu0 0.0
      %230 = vmatprep.subr.mxu0 0.0
      %231 = vmatpush2.msra.mxu0 0.0
      %232 = vmatprep.subr.mxu0 0.0
      %233 = vmatpush2.msra.mxu0 0.0
      %234 = vmatprep.subr.mxu0 0.0
      %235 = vmatpush2.msra.mxu0 0.0
      %236 = vmatprep.subr.mxu0 0.0
      %237 = vmatpush2.msra.mxu0 0.0
      %238 = vmatprep.subr.mxu0 0.0
      %239 = vmatpush2.msra.mxu0 0.0
      %240 = vmatprep.subr.mxu0 0.0
      %241 = vmatpush2.msra.mxu0 0.0
      %242 = vmatprep.subr.mxu0 0.0
      %243 = vmatpush2.msra.mxu0 0.0
      %244 = vmatprep.subr.mxu0 0.0
      %245 = vmatpush2.msra.mxu0 0.0
      %246 = vmatprep.subr.mxu0 0.0
      %247 = vmatpush2.msra.mxu0 0.0
      %248 = vmatprep.subr.mxu0 0.0
      %249 = vmatpush2.msra.mxu0 0.0
      %250 = vmatprep.subr.mxu0 0.0
      %251 = vmatpush2.msra.mxu0 0.0
      %252 = vmatprep.subr.mxu0 0.0
      %253 = vmatpush2.msra.mxu0 0.0
      %254 = vmatprep.subr.mxu0 0.0
      %255 = vmatpush2.msra.mxu0 0.0
      %256 = vmatprep.subr.mxu0 0.0
      %257 = vmatpush2.msra.mxu0 0.0
      %258 = vmatprep.subr.mxu0 0.0
      %259 = vmatpush2.msra.mxu0 0.0
      %260 = vmatprep.mubr.f32.mxu0 0.0
      %261 = vmatmul.mubr.f32.gmra.mxu0 %v189
      %v262 = vpop.f32.mrf.mxu0
      %v263 = vadd.f32 0.0, %v262
      %v264 = vpop.f32.mrf.mxu0
      %v265 = vadd.f32 0.0, %v264
      %266 = vdwg.mxu0
      %267 = vst [vmem:[%s181] sm:$0xff] %v263
      %268 = vst [vmem:[%s181 + $0x8] sm:$0xff] %v265
      %s269 = smul.u32 2, %s18
      %p270 = scmp.lt.s32.totalorder %s17, 1
      %s271 = scalar_select %p270, %s17, 1
      %p272 = scmp.lt.s32.totalorder %s269, 1
      %s273 = scalar_select %p272, %s269, 1
      %s274 = smul.addr %s271, 2
      %s275 = sadd.s32 %s273, %s274
      %s276 = smul.addr %s275, 8
      %s277 = scalar_lea.vmem %s2, %s276
      // Predicated region
      $region29: #{projector_block.1} parent=27 // pred_check
        %p278 = pneg %p94
      $region30: #{projector_block.1} parent=27 // pred_check_branch
        %280 = sbr.rel (%p278) target = $region32
      $region31: #{projector_block.1} parent=27 // pred_region
        %s281 = smul.u32 2, %s18
      $region32: #{projector_block.1} parent=27 // pred_fallthru
        _
    $region28: #{projector_block.1} parent=5 // pred_fallthru
      _
    %p282 = scmp.le.s32.totalorder 2, %s8
    // Predicated region
    $region33: #{projector_block.1} parent=5 // pred_check
      %p283 = pneg %p282
    $region34: #{projector_block.1} parent=5 // pred_check_branch
      %285 = sbr.rel (%p283) target = $region36
    $region35: #{projector_block.1} parent=5 // pred_region
      %s286 = ssub.s32 %s8, 2
      // Predicated region
      $region37: #{projector_block.1} parent=35 // pred_check
        %p287 = pneg %p100
      $region38: #{projector_block.1} parent=35 // pred_check_branch
        %289 = sbr.rel (%p287) target = $region40
      $region39: #{projector_block.1} parent=35 // pred_region
        %s290 = smul.u32 2, %s20
        %p291 = scmp.lt.s32.totalorder %s19, 1
        %s292 = scalar_select %p291, %s19, 1
        %p293 = scmp.lt.s32.totalorder %s290, 1
        %s294 = scalar_select %p293, %s290, 1
        %s295 = smul.addr %s292, 2
        %s296 = sadd.s32 %s294, %s295
        %s297 = smul.addr %s296, 8
        %s298 = scalar_lea.vmem %s2, %s297
      $region40: #{projector_block.1} parent=35 // pred_fallthru
        _
    $region36: #{projector_block.1} parent=5 // pred_fallthru
      _
  $region6: #{projector_block.1} parent=0 // loop_footer
    %s12 = sadd.s32 1, %s8
  $region7: #{projector_block.1} parent=0 // loop_footer_branch
    %7 = sbr.rel target = $region3
  $region8: #{projector_block.1} parent=0 // loop_exit
    _

</llo_original>
